<compile_context>
chip_gen: v5e
topology: v5e:2x2
jax: 0.10.0
libtpu: 0.0.40
codegen_flags: <defaults>
</compile_context>

<pallas_src>
import functools

import jax
import jax.numpy as jnp
from jax import lax
from jax.experimental import pallas as pl
from jax.experimental.pallas import tpu as pltpu

EPS = 1e-5  # nn.LayerNorm default


def _round_up(x: int, m: int) -> int:
    return (x + m - 1) // m * m


def _row_align(cdt_bytes: int, out_bytes: int) -> int:
    # Keep row tiles aligned to the packed sublane tiling: 8 rows for f32, 16 for bf16,
    # 32 for int8/fp8 (whichever operand is narrowest).
    return max(8, 32 // min(cdt_bytes, out_bytes))


def _vmem_limit_bytes() -> int:
    # Generation-aware VMEM limit: ~96 MiB on v5e/v6e (128 MiB physical), ~48 MiB on v7x
    # (64 MiB physical).  Conservative fallback if the query is unavailable.
    cap = 64 * 1024 * 1024
    try:
        info = pltpu.get_tpu_info()
        cap = int(getattr(info, "vmem_capacity_bytes", cap))
    except Exception:  # pragma: no cover - query not available in this environment
        pass
    return min((cap * 3) // 4, 96 * 1024 * 1024)


def _pick_row_tile(M: int, Kp: int, Cp: int, cdt_bytes: int, out_bytes: int,
                   vmem_limit: int) -> int:
    """Largest row tile fitting the VMEM budget, with grid-balance / alignment tweaks."""
    align = _row_align(cdt_bytes, out_bytes)
    # Per-row bytes: double-buffered input tile + double-buffered output tile
    # + ~4 live f32 (tm, Cp) epilogue temporaries.
    per_row = 2 * Kp * cdt_bytes + 2 * Cp * out_bytes + 4 * Cp * 4
    # Fixed bytes: resident weight (counted double-buffered, see header note) + params.
    fixed = 2 * Kp * Cp * cdt_bytes + 2 * 3 * Cp * 4
    budget = (vmem_limit * 3) // 5          # leave headroom under the compiler limit
    tm = max(align, (budget - fixed) // per_row)
    tm = min(tm, 4096)
    tm = max((tm // align) * align, align)
    # Prefer >= 8 grid steps (v7x megacore balance, pipeline warm-up amortization), but
    # never shrink below 256 rows for it.
    tm_grid = _round_up(max(1, -(-M // 8)), align)
    tm = min(tm, max(256, tm_grid))
    tm = min(tm, _round_up(M, align))
    tm = max(tm, align)
    # Snap to a nearby divisor of M (multiple of `align`) to skip the row-padding copy.
    if M % tm:
        for cand in range(tm, max(align, (3 * tm) // 4) - 1, -align):
            if M % cand == 0:
                tm = cand
                break
    return tm


def _downsample_kernel(p_ref, w_ref, prm_ref, o_ref, *, cout_real, cout_padded):
    # p_ref:   (tm, Kp)   patch rows (compute dtype; zero-padded K columns)
    # w_ref:   (Kp, Cp)   flattened conv weight (zero-padded rows / cols)
    # prm_ref: (3,  Cp)   f32 rows = [conv bias; LN gamma; LN beta], zero-padded columns
    # o_ref:   (tm, Cp)
    # Conv-as-matmul on the MXU with f32 accumulation; the epilogue stays in f32.
    y = jnp.dot(p_ref[...], w_ref[...], preferred_element_type=jnp.float32)
    prm = prm_ref[...]
    y = y + prm[0:1, :]                      # padded lanes stay exactly 0 (zero w / bias)

    # Centered two-pass LayerNorm statistics over the *real* Cout channels.
    inv_n = jnp.float32(1.0 / cout_real)
    mean = jnp.sum(y, axis=-1, keepdims=True) * inv_n      # padded lanes contribute 0
    centered = y - mean
    if cout_padded != cout_real:
        # Padded lanes hold -mean after centering; mask them out of the variance.
        col = lax.broadcasted_iota(jnp.int32, centered.shape, 1)
        centered_stat = jnp.where(col < cout_real, centered, 0.0)
    else:
        centered_stat = centered
    var = jnp.sum(centered_stat * centered_stat, axis=-1, keepdims=True) * inv_n

    y_hat = centered * lax.rsqrt(var + EPS)
    out = y_hat * prm[1:2, :] + prm[2:3, :]  # padded lanes: gamma=0, beta=0 -> exactly 0
    o_ref[...] = out.astype(o_ref.dtype)


@functools.partial(jax.jit, static_argnames=("stride", "tm", "compute_dtype", "out_dtype",
                                              "output_layout"))
def downsample(x_nchw, conv_w, conv_b, ln_gamma, ln_beta, *, stride=4, tm=None,
               compute_dtype=None, out_dtype=None, output_layout="NCHW"):
    """Forward pass of Downsample(in_ch, out_ch, stride, overlap=False).

    Args:
      x_nchw:   (B, Cin, H, W)      PyTorch-layout input
      conv_w:   (Cout, Cin, s, s)   PyTorch-layout conv weight
      conv_b:   (Cout,)
      ln_gamma: (Cout,)
      ln_beta:  (Cout,)
      stride:   patch size / stride
      tm:       optional row-tile override; None -> VMEM-budgeted, generation-aware choice
      compute_dtype: dtype of the DMA'd matmul operands.  None -> bf16 when the input is
                f32 (bandwidth-bound op), else the input dtype.  Accumulation is always f32.
      out_dtype: kernel output dtype.  None -> input dtype.  bf16 halves store traffic.
      output_layout: "NCHW" (PyTorch-compatible, default; costs one extra transpose pass)
                or "NHWC" (channels-last, no extra pass).
    """
    B, Cin, H, W = x_nchw.shape
    Cout = conv_w.shape[0]
    s = stride
    Ho, Wo = H // s, W // s
    K = s * s * Cin
    M = B * Ho * Wo

    if compute_dtype is not None:
        cdt = jnp.dtype(compute_dtype)
    elif x_nchw.dtype == jnp.float32:
        cdt = jnp.dtype(jnp.bfloat16)        # default: halve input-side HBM bytes
    else:
        cdt = jnp.dtype(x_nchw.dtype)
    odt = jnp.dtype(out_dtype) if out_dtype is not None else jnp.dtype(x_nchw.dtype)
    cdt_b, odt_b = cdt.itemsize, odt.itemsize

    Kp = _round_up(K, 128)                   # lane-dense LHS loads; free in HBM bytes
    Cp = _round_up(Cout, 128)                # lane-dense (unmasked) output stores

    # ---- glue (one fused XLA copy pass): NCHW -> zero-padded (M, Kp) patch matrix -------
    # TODO(synk): fold this patchify into the kernel so the input is read from HBM exactly
    #             once (see header); kept outside for lowering robustness.
    x_crop = x_nchw[:, :, :Ho * s, :Wo * s]
    x_nhwc = jnp.transpose(x_crop, (0, 2, 3, 1))
    patches = x_nhwc.reshape(B, Ho, s, Wo, s, Cin)
    patches = jnp.transpose(patches, (0, 1, 3, 2, 4, 5)).reshape(M, K).astype(cdt)
    if Kp != K:
        patches = jnp.pad(patches, ((0, 0), (0, Kp - K)))

    # Conv weight (Cout, Cin, kh, kw) -> (kh, kw, Cin, Cout) -> (Kp, Cp), zero-padded.
    w_mat = jnp.transpose(conv_w, (2, 3, 1, 0)).reshape(K, Cout).astype(cdt)
    w_mat = jnp.pad(w_mat, ((0, Kp - K), (0, Cp - Cout)))
    # bias / gamma / beta folded into one (3, Cp) f32 operand.
    # NOTE: the ZERO padding of gamma/beta is what keeps the padded output lanes exactly 0
    # (and the stats divide by the real Cout) — do not change the pad value.
    prm = jnp.stack([conv_b, ln_gamma, ln_beta]).astype(jnp.float32)
    prm = jnp.pad(prm, ((0, 0), (0, Cp - Cout)))

    # ---- row tiling -----------------------------------------------------------------------
    vmem_limit = _vmem_limit_bytes()
    align = _row_align(cdt_b, odt_b)
    tm_eff = tm if tm is not None else _pick_row_tile(M, Kp, Cp, cdt_b, odt_b, vmem_limit)
    tm_eff = max(align, _round_up(int(tm_eff), align))

    Mp = _round_up(M, tm_eff)
    if Mp != M:
        # Padded rows are all-zero -> y == bias, var ~ 0 -> large finite values in rows that
        # are sliced off below and never read.
        patches = jnp.pad(patches, ((0, Mp - M), (0, 0)))

    grid = (Mp // tm_eff,)

    cost = pl.CostEstimate(
        flops=2 * Mp * Kp * Cp,
        transcendentals=Mp,
        bytes_accessed=(Mp * Kp * cdt_b + Kp * Cp * cdt_b + 3 * Cp * 4 + Mp * Cp * odt_b),
    )

    kernel = functools.partial(_downsample_kernel, cout_real=Cout, cout_padded=Cp)

    out_flat = pl.pallas_call(
        kernel,
        out_shape=jax.ShapeDtypeStruct((Mp, Cp), odt),
        grid_spec=pltpu.PrefetchScalarGridSpec(
            num_scalar_prefetch=0,
            grid=grid,
            in_specs=[
                pl.BlockSpec((tm_eff, Kp), lambda i: (i, 0)),   # patch rows
                pl.BlockSpec((Kp, Cp), lambda i: (0, 0)),       # weight (grid-invariant)
                pl.BlockSpec((3, Cp), lambda i: (0, 0)),        # bias/gamma/beta
            ],
            out_specs=pl.BlockSpec((tm_eff, Cp), lambda i: (i, 0)),
        ),
        compiler_params=pltpu.CompilerParams(
            dimension_semantics=("parallel",),
            vmem_limit_bytes=int(vmem_limit),
        ),
        cost_estimate=cost,
    )(patches, w_mat, prm)

    # (Mp, Cp) -> drop padding -> (B, Ho, Wo, Cout)
    out = out_flat[:M, :Cout].reshape(B, Ho, Wo, Cout)
    if output_layout == "NHWC":
        return out                                   # channels-last: no extra HBM pass
    return jnp.transpose(out, (0, 3, 1, 2))          # PyTorch-compatible NCHW


def _reference(x_nchw, conv_w, conv_b, ln_gamma, ln_beta, stride=4):
    """Pure-JAX reference of Conv2d(stride=kernel, pad=0) + LayerNorm2d."""
    y = lax.conv_general_dilated(
        x_nchw.astype(jnp.float32),
        conv_w.astype(jnp.float32),
        window_strides=(stride, stride),
        padding="VALID",
        dimension_numbers=("NCHW", "OIHW", "NCHW"),
    ) + conv_b.reshape(1, -1, 1, 1)
    mean = jnp.mean(y, axis=1, keepdims=True)
    var = jnp.mean((y - mean) ** 2, axis=1, keepdims=True)
    y_hat = (y - mean) * lax.rsqrt(var + EPS)
    return y_hat * ln_gamma.reshape(1, -1, 1, 1) + ln_beta.reshape(1, -1, 1, 1)


if __name__ == "__main__":
    B, Cin, H, W = 2, 4, 16, 16
    Cout, stride = 32, 4

    key = jax.random.PRNGKey(0)
    k_x, k_w, k_b, k_g, k_beta = jax.random.split(key, 5)

    x = jax.random.normal(k_x, (B, Cin, H, W), dtype=jnp.float32)
    conv_w = jax.random.normal(k_w, (Cout, Cin, stride, stride), jnp.float32) * 0.05
    conv_b = jax.random.normal(k_b, (Cout,), jnp.float32) * 0.01
    ln_gamma = 1.0 + 0.1 * jax.random.normal(k_g, (Cout,), jnp.float32)
    ln_beta = 0.1 * jax.random.normal(k_beta, (Cout,), jnp.float32)

    ref = _reference(x, conv_w, conv_b, ln_gamma, ln_beta, stride=stride)

    # f32 operand path: tight check against the f32 reference.
    out_f32 = downsample(x, conv_w, conv_b, ln_gamma, ln_beta, stride=stride,
                         compute_dtype=jnp.float32)
    out_f32 = jax.block_until_ready(out_f32)
    assert out_f32.shape == (B, Cout, H // stride, W // stride), out_f32.shape
    assert jnp.allclose(out_f32, ref, atol=1e-4, rtol=1e-4), float(jnp.abs(out_f32 - ref).max())

    # Default path: bf16 matmul operands (f32 accumulation / f32 LayerNorm epilogue).
    out_bf = downsample(x, conv_w, conv_b, ln_gamma, ln_beta, stride=stride)
    out_bf = jax.block_until_ready(out_bf)
    assert out_bf.shape == (B, Cout, H // stride, W // stride), out_bf.shape
    assert jnp.allclose(out_bf, ref, atol=1e-1, rtol=1e-1), float(jnp.abs(out_bf - ref).max())

    # Channels-last output path (skips the post-kernel NCHW transpose).
    out_nhwc = downsample(x, conv_w, conv_b, ln_gamma, ln_beta, stride=stride,
                          output_layout="NHWC")
    out_nhwc = jax.block_until_ready(out_nhwc)
    assert out_nhwc.shape == (B, H // stride, W // stride, Cout), out_nhwc.shape
    assert jnp.allclose(jnp.transpose(out_nhwc, (0, 3, 1, 2)), ref, atol=1e-1, rtol=1e-1)

    print("KERNEL_OK")
</pallas_src>

<mosaic_0001>
module attributes {stable_mosaic.version = 11 : i64} {
  func.func @_downsample_kernel(%arg0: i32, %arg1: memref<32x128xf32, #tpu.memory_space<vmem>>, %arg2: memref<128x128xf32, #tpu.memory_space<vmem>>, %arg3: memref<3x128xf32, #tpu.memory_space<vmem>>, %arg4: memref<32x128xf32, #tpu.memory_space<vmem>>) attributes {dimension_semantics = [#tpu.dimension_semantics<parallel>], iteration_bounds = array<i64: 1>, scalar_prefetch = 0 : i64, scratch_operands = 0 : i64, tpu.core_type = #tpu.core_type<tc>, window_params = [{transform_indices = @transform_0, window_bounds = array<i64: 32, 128>}, {pipeline_mode = #tpu.pipeline_mode<synchronous>, transform_indices = @transform_1, window_bounds = array<i64: 128, 128>}, {pipeline_mode = #tpu.pipeline_mode<synchronous>, transform_indices = @transform_2, window_bounds = array<i64: 3, 128>}, {transform_indices = @transform_3, window_bounds = array<i64: 32, 128>}]} {
    %c0 = arith.constant 0 : index
    %c0_0 = arith.constant 0 : index
    %0 = vector.load %arg1[%c0, %c0_0] : memref<32x128xf32, #tpu.memory_space<vmem>>, vector<32x128xf32>
    %c0_1 = arith.constant 0 : index
    %c0_2 = arith.constant 0 : index
    %1 = vector.load %arg2[%c0_1, %c0_2] : memref<128x128xf32, #tpu.memory_space<vmem>>, vector<128x128xf32>
    %cst = arith.constant dense<0.000000e+00> : vector<32x128xf32>
    %2 = tpu.matmul %0, %1, %cst {dimension_numbers = #tpu.dot_dimension_numbers<[1], [0], [0], [1], [0, 0, 1, 1], [], []>} : vector<32x128xf32>, vector<128x128xf32>, vector<32x128xf32> -> vector<32x128xf32>
    %c0_3 = arith.constant 0 : index
    %c0_4 = arith.constant 0 : index
    %3 = vector.load %arg3[%c0_3, %c0_4] : memref<3x128xf32, #tpu.memory_space<vmem>>, vector<3x128xf32>
    %4 = vector.extract_strided_slice %3 {offsets = [0, 0], sizes = [1, 128], strides = [1, 1]} : vector<3x128xf32> to vector<1x128xf32>
    %5 = vector.broadcast %4 : vector<1x128xf32> to vector<32x128xf32>
    %6 = arith.addf %2, %5 : vector<32x128xf32>
    %cst_5 = arith.constant dense<0.000000e+00> : vector<32xf32>
    %7 = vector.multi_reduction <add>, %6, %cst_5 [1] : vector<32x128xf32> to vector<32xf32>
    %8 = vector.shape_cast %7 : vector<32xf32> to vector<32x1xf32>
    %cst_6 = arith.constant 3.125000e-02 : f32
    %9 = vector.broadcast %cst_6 : f32 to vector<32x1xf32>
    %10 = arith.mulf %8, %9 : vector<32x1xf32>
    %11 = vector.broadcast %10 : vector<32x1xf32> to vector<32x128xf32>
    %12 = arith.subf %6, %11 : vector<32x128xf32>
    %13 = tpu.iota {dimensions = array<i32: 1>} : vector<32x128xi32>
    %c32_i32 = arith.constant 32 : i32
    %14 = vector.broadcast %c32_i32 : i32 to vector<32x128xi32>
    %15 = arith.cmpi slt, %13, %14 : vector<32x128xi32>
    %cst_7 = arith.constant 0.000000e+00 : f32
    %16 = vector.broadcast %cst_7 : f32 to vector<32x128xf32>
    %17 = arith.select %15, %12, %16 : vector<32x128xi1>, vector<32x128xf32>
    %18 = arith.mulf %17, %17 : vector<32x128xf32>
    %cst_8 = arith.constant dense<0.000000e+00> : vector<32xf32>
    %19 = vector.multi_reduction <add>, %18, %cst_8 [1] : vector<32x128xf32> to vector<32xf32>
    %20 = vector.shape_cast %19 : vector<32xf32> to vector<32x1xf32>
    %cst_9 = arith.constant 3.125000e-02 : f32
    %21 = vector.broadcast %cst_9 : f32 to vector<32x1xf32>
    %22 = arith.mulf %20, %21 : vector<32x1xf32>
    %cst_10 = arith.constant 9.99999974E-6 : f32
    %23 = vector.broadcast %cst_10 : f32 to vector<32x1xf32>
    %24 = arith.addf %22, %23 : vector<32x1xf32>
    %25 = math.rsqrt %24 : vector<32x1xf32>
    %26 = vector.broadcast %25 : vector<32x1xf32> to vector<32x128xf32>
    %27 = arith.mulf %12, %26 : vector<32x128xf32>
    %28 = vector.extract_strided_slice %3 {offsets = [1, 0], sizes = [1, 128], strides = [1, 1]} : vector<3x128xf32> to vector<1x128xf32>
    %29 = vector.broadcast %28 : vector<1x128xf32> to vector<32x128xf32>
    %30 = arith.mulf %27, %29 : vector<32x128xf32>
    %31 = vector.extract_strided_slice %3 {offsets = [2, 0], sizes = [1, 128], strides = [1, 1]} : vector<3x128xf32> to vector<1x128xf32>
    %32 = vector.broadcast %31 : vector<1x128xf32> to vector<32x128xf32>
    %33 = arith.addf %30, %32 : vector<32x128xf32>
    %c0_11 = arith.constant 0 : index
    %c0_12 = arith.constant 0 : index
    %34 = vector.load %arg4[%c0_11, %c0_12] : memref<32x128xf32, #tpu.memory_space<vmem>>, vector<32x128xf32>
    tpu.vector_store %arg4[%c0_11, %c0_12], %33 {strides = array<i32>} : memref<32x128xf32, #tpu.memory_space<vmem>>, vector<32x128xf32>,
    return
  }
  func.func @transform_0(%arg0: i32) -> (i32, i32) {
    %c0_i32 = arith.constant 0 : i32
    %c0_i32_0 = arith.constant 0 : i32
    return %arg0, %c0_i32 : i32, i32
  }
  func.func @transform_1(%arg0: i32) -> (i32, i32) {
    %c0_i32 = arith.constant 0 : i32
    %c0_i32_0 = arith.constant 0 : i32
    %c0_i32_1 = arith.constant 0 : i32
    return %c0_i32, %c0_i32_0 : i32, i32
  }
  func.func @transform_2(%arg0: i32) -> (i32, i32) {
    %c0_i32 = arith.constant 0 : i32
    %c0_i32_0 = arith.constant 0 : i32
    %c0_i32_1 = arith.constant 0 : i32
    return %c0_i32, %c0_i32_0 : i32, i32
  }
  func.func @transform_3(%arg0: i32) -> (i32, i32) {
    %c0_i32 = arith.constant 0 : i32
    %c0_i32_0 = arith.constant 0 : i32
    return %arg0, %c0_i32 : i32, i32
  }
}

</mosaic_0001>

<llo_original>
// kernel: downsample.1
$region0: #{downsample.1}
  #allocation0 [shape = 'u32[]', space=smem, size = 0x4, offset = 0x4, fixed_abs, tag = 'smem constant byte address 0x4 - core index']
  #allocation1 [shape = 'u32[72,128]{1,0:T(1,128)}', space=vmem, size = 0x9000, scoped, tag = 'internal scratch']
  %s0 = inlined_call_operand.vmem [shape: f32[32,128], index: 0, kind: input, shape index: {}]
  %s1 = inlined_call_operand.vmem [shape: f32[128,128], index: 1, kind: input, shape index: {}]
  %s2 = inlined_call_operand.vmem [shape: f32[3,128], index: 2, kind: input, shape index: {}]
  %s3 = inlined_call_operand.hbm [shape: f32[32,128], index: 3, kind: output, shape index: {}]
  %s4 = sld [smem:[#allocation0]]
  $region22: #{downsample.1} parent=0
    _
  %s6 = ssub.s32 1, %s4
  %s7 = scalar_select 0, %s6, %s4
  $region1: #{downsample.1} parent=0
    #allocation2 [shape = 'u8[16384]{0}', space=vmem, size = 0x4000, scoped, tag = 'output window, operand 0, single buffered']
    #allocation3 [shape = 's32[1]{0}', space=sflag, size = 0x4, scoped, tag = 'scoped memory for downsample.1']
    %8 = vsyncpa [#allocation3], 0
    // Predicated region
    $region2: #{downsample.1} parent=1 // pred_check
      _
    $region3: #{downsample.1} parent=1 // pred_check_branch
      %10 = sbr.rel (0) target = $region5
    $region4: #{downsample.1} parent=1 // pred_region
      _
    $region5: #{downsample.1} parent=1 // pred_fallthru
      _
    // Predicated region
    $region6: #{downsample.1} parent=1 // pred_check
      _
    $region7: #{downsample.1} parent=1 // pred_check_branch
      %12 = sbr.rel (0) target = $region9
    $region8: #{downsample.1} parent=1 // pred_region
      _
    $region9: #{downsample.1} parent=1 // pred_fallthru
      _
    // Predicated region
    $region10: #{downsample.1} parent=1 // pred_check
      _
    $region11: #{downsample.1} parent=1 // pred_check_branch
      %14 = sbr.rel (0) target = $region13
    $region12: #{downsample.1} parent=1 // pred_region
      _
    $region13: #{downsample.1} parent=1 // pred_fallthru
      _
    %v15 = vld [vmem:[%s0] sm:$0xff]
    %v16 = vld [vmem:[%s0 + $0x8] sm:$0xff]
    %v17 = vld [vmem:[%s0 + $0x10] sm:$0xff]
    %v18 = vld [vmem:[%s0 + $0x18] sm:$0xff]
    %v19 = vld [vmem:[%s1] sm:$0xff]
    %v20 = vld [vmem:[%s1 + $0x8] sm:$0xff]
    %v21 = vld [vmem:[%s1 + $0x10] sm:$0xff]
    %v22 = vld [vmem:[%s1 + $0x18] sm:$0xff]
    %v23 = vld [vmem:[%s1 + $0x20] sm:$0xff]
    %v24 = vld [vmem:[%s1 + $0x28] sm:$0xff]
    %v25 = vld [vmem:[%s1 + $0x30] sm:$0xff]
    %v26 = vld [vmem:[%s1 + $0x38] sm:$0xff]
    %v27 = vld [vmem:[%s1 + $0x40] sm:$0xff]
    %v28 = vld [vmem:[%s1 + $0x48] sm:$0xff]
    %v29 = vld [vmem:[%s1 + $0x50] sm:$0xff]
    %v30 = vld [vmem:[%s1 + $0x58] sm:$0xff]
    %v31 = vld [vmem:[%s1 + $0x60] sm:$0xff]
    %v32 = vld [vmem:[%s1 + $0x68] sm:$0xff]
    %v33 = vld [vmem:[%s1 + $0x70] sm:$0xff]
    %v34 = vld [vmem:[%s1 + $0x78] sm:$0xff]
    %v35 = vld [vmem:[%s2] sm:$0x7]
    %v36 = vperm.slane %v35, 0
    %37 = vmatpush.msra.mxu0 %v34
    %38 = vmatpush.msra.mxu0 %v33
    %39 = vmatpush.msra.mxu0 %v32
    %40 = vmatpush.msra.mxu0 %v31
    %41 = vmatpush.msra.mxu0 %v30
    %42 = vmatpush.msra.mxu0 %v29
    %43 = vmatpush.msra.mxu0 %v28
    %44 = vmatpush.msra.mxu0 %v27
    %45 = vmatpush.msra.mxu0 %v26
    %46 = vmatpush.msra.mxu0 %v25
    %47 = vmatpush.msra.mxu0 %v24
    %48 = vmatpush.msra.mxu0 %v23
    %49 = vmatpush.msra.mxu0 %v22
    %50 = vmatpush.msra.mxu0 %v21
    %51 = vmatpush.msra.mxu0 %v20
    %52 = vmatpush.msra.mxu0 %v19
    %53 = vmatmul.f32.gmra.mxu0 %v15
    %v54 = vpop.f32.mrf.mxu0
    %v55 = vadd.f32 %v36, %v54
    %56 = vmatmul.f32.gmra.mxu0 %v16
    %v57 = vpop.f32.mrf.mxu0
    %v58 = vadd.f32 %v36, %v57
    %59 = vmatmul.f32.gmra.mxu0 %v17
    %v60 = vpop.f32.mrf.mxu0
    %v61 = vadd.f32 %v36, %v60
    %62 = vmatmul.f32.gmra.mxu0 %v18
    %v63 = vpop.f32.mrf.mxu0
    %v64 = vadd.f32 %v36, %v63
    %65 = vdwg.mxu0
    %66 = vadd.xlane.f32.xlu0 %v55
    %v67 = vpop.xlane.xlu0 %66
    %68 = vadd.xlane.f32.xlu0 %v58
    %v69 = vpop.xlane.xlu0 %68
    %70 = vadd.xlane.f32.xlu0 %v61
    %v71 = vpop.xlane.xlu0 %70
    %72 = vadd.xlane.f32.xlu0 %v64
    %v73 = vpop.xlane.xlu0 %72
    %v74 = vmul.f32 %v67, 0.03125
    %v75 = vmul.f32 %v69, 0.03125
    %v76 = vmul.f32 %v71, 0.03125
    %v77 = vmul.f32 %v73, 0.03125
    %v78 = vsub.f32 %v55, %v74
    %v79 = vsub.f32 %v58, %v75
    %v80 = vsub.f32 %v61, %v76
    %v81 = vsub.f32 %v64, %v77
    %v82 = vlaneseq
    %v83 = vand.u32 %v82, 127
    %vm84 = vcmp.lt.s32.totalorder %v83, 32
    %v85 = vsel %vm84, %v78, 0.0
    %v86 = vsel %vm84, %v79, 0.0
    %v87 = vsel %vm84, %v80, 0.0
    %v88 = vsel %vm84, %v81, 0.0
    %v89 = vmul.f32 %v85, %v85
    %v90 = vmul.f32 %v86, %v86
    %v91 = vmul.f32 %v87, %v87
    %v92 = vmul.f32 %v88, %v88
    %93 = vadd.xlane.f32.xlu0 %v89
    %v94 = vpop.xlane.xlu0 %93
    %95 = vadd.xlane.f32.xlu0 %v90
    %v96 = vpop.xlane.xlu0 %95
    %97 = vadd.xlane.f32.xlu0 %v91
    %v98 = vpop.xlane.xlu0 %97
    %99 = vadd.xlane.f32.xlu0 %v92
    %v100 = vpop.xlane.xlu0 %99
    %v101 = vmul.f32 %v94, 0.03125
    %v102 = vmul.f32 %v96, 0.03125
    %v103 = vmul.f32 %v98, 0.03125
    %v104 = vmul.f32 %v100, 0.03125
    %v105 = vadd.f32 %v101, 1e-05
    %v106 = vadd.f32 %v102, 1e-05
    %v107 = vadd.f32 %v103, 1e-05
    %v108 = vadd.f32 %v104, 1e-05
    %v109 = vrsqrt.pop %v105
    %v110 = vmul.f32 %v109, %v105
    %v111 = vmul.f32 %v110, %v109
    %v112 = vmul.f32 0.5, %v111
    %v113 = vsub.f32 1.5, %v112
    %v114 = vmul.f32 %v109, %v113
    %vm115 = vweird.f32 %v105
    %vm116 = vweird.f32 %v109
    %vm117 = vmor %vm115, %vm116
    %v118 = vsel %vm117, %v109, %v114
    %v119 = vrsqrt.pop %v106
    %v120 = vmul.f32 %v119, %v106
    %v121 = vmul.f32 %v120, %v119
    %v122 = vmul.f32 0.5, %v121
    %v123 = vsub.f32 1.5, %v122
    %v124 = vmul.f32 %v119, %v123
    %vm125 = vweird.f32 %v106
    %vm126 = vweird.f32 %v119
    %vm127 = vmor %vm125, %vm126
    %v128 = vsel %vm127, %v119, %v124
    %v129 = vrsqrt.pop %v107
    %v130 = vmul.f32 %v129, %v107
    %v131 = vmul.f32 %v130, %v129
    %v132 = vmul.f32 0.5, %v131
    %v133 = vsub.f32 1.5, %v132
    %v134 = vmul.f32 %v129, %v133
    %vm135 = vweird.f32 %v107
    %vm136 = vweird.f32 %v129
    %vm137 = vmor %vm135, %vm136
    %v138 = vsel %vm137, %v129, %v134
    %v139 = vrsqrt.pop %v108
    %v140 = vmul.f32 %v139, %v108
    %v141 = vmul.f32 %v140, %v139
    %v142 = vmul.f32 0.5, %v141
    %v143 = vsub.f32 1.5, %v142
    %v144 = vmul.f32 %v139, %v143
    %vm145 = vweird.f32 %v108
    %vm146 = vweird.f32 %v139
    %vm147 = vmor %vm145, %vm146
    %v148 = vsel %vm147, %v139, %v144
    %v149 = vmul.f32 %v78, %v118
    %v150 = vmul.f32 %v79, %v128
    %v151 = vmul.f32 %v80, %v138
    %v152 = vmul.f32 %v81, %v148
    %v153 = vperm.slane %v35, 1
    %v154 = vmul.f32 %v149, %v153
    %v155 = vmul.f32 %v150, %v153
    %v156 = vmul.f32 %v151, %v153
    %v157 = vmul.f32 %v152, %v153
    %v158 = vperm.slane %v35, 2
    %v159 = vadd.f32 %v154, %v158
    %v160 = vadd.f32 %v155, %v158
    %v161 = vadd.f32 %v156, %v158
    %v162 = vadd.f32 %v157, %v158
    %163 = vst [vmem:[#allocation2] sm:$0xff] %v159
    %164 = vst [vmem:[#allocation2 + $0x8] sm:$0xff] %v160
    %165 = vst [vmem:[#allocation2 + $0x10] sm:$0xff] %v161
    %166 = vst [vmem:[#allocation2 + $0x18] sm:$0xff] %v162
    // Predicated region
    $region14: #{downsample.1} parent=1 // pred_check
      _
    $region15: #{downsample.1} parent=1 // pred_check_branch
      %168 = sbr.rel (0) target = $region17
    $region16: #{downsample.1} parent=1 // pred_region
      %170 = vsyncadd [#allocation3], 0
      %s171 = sshll.u32 [#allocation2], 4
      %s172 = int_to_ptr.vmem [resolvable:$true] %s171
      %s173 = sshll.u32 %s3, 4
      %s174 = int_to_ptr.hbm [resolvable:$true] %s173
      %179 = dma.vmem_to_hbm [thread:$0]  %s172, 512, %s174, [#allocation3], 128, 128, 8
    $region17: #{downsample.1} parent=1 // pred_fallthru
      _
    // Predicated region
    $region18: #{downsample.1} parent=1 // pred_check
      _
    $region19: #{downsample.1} parent=1 // pred_check_branch
      %181 = sbr.rel (0) target = $region21
    $region20: #{downsample.1} parent=1 // pred_region
      %183 = dma.done [#allocation3], 512
    $region21: #{downsample.1} parent=1 // pred_fallthru
      _
    %184 = vsyncpa [#allocation3], 1

</llo_original>
